<compile_context>
chip_gen: v7x
topology: tpu7x:2x2x1
jax: 0.10.0
libtpu: 0.0.40
codegen_flags: <defaults>
</compile_context>

<pallas_src>
import functools

import jax
import jax.numpy as jnp
from jax.experimental import pallas as pl
from jax.experimental.pallas import tpu as pltpu

C_IN = 128          # SwiftNet logits head always takes 128-channel features
EPS = 1e-5          # PyTorch BatchNorm2d default eps


# ---------------------------------------------------------------------------
# Kernel 1 (two-pass path): per-channel partial sum / sum-of-squares.
# Grid: (N, P, inner).  Axes 0,1 "parallel" (distinct accumulators -> megacore
# split even at N=1), axis 2 "arbitrary" (serial accumulation into the block).
# ---------------------------------------------------------------------------
def _stats_kernel(x_ref, sum_ref, sq_ref):
    @pl.when(pl.program_id(2) == 0)
    def _():
        sum_ref[...] = jnp.zeros_like(sum_ref)
        sq_ref[...] = jnp.zeros_like(sq_ref)

    x = x_ref[0].astype(jnp.float32)                        # (C, t)
    sum_ref[0, 0] += jnp.sum(x, axis=1, keepdims=True)      # (C, 1)
    sq_ref[0, 0] += jnp.sum(x * x, axis=1, keepdims=True)   # (C, 1)


# ---------------------------------------------------------------------------
# Kernel 2 (two-pass path): y = relu(scale*x + shift); out = W @ y + b
# scale/shift folded once in the wrapper (hoisted out of the tile loop).
# ---------------------------------------------------------------------------
def _bn_relu_conv1x1_kernel(x_ref, scale_ref, shift_ref, w_ref, b_ref, o_ref):
    x = x_ref[0].astype(jnp.float32)                                  # (C, t)
    y = jnp.maximum(x * scale_ref[...] + shift_ref[...], 0.0)         # BN + ReLU
    out = jnp.dot(w_ref[...], y, preferred_element_type=jnp.float32)  # (O, t)
    o_ref[0] = (out + b_ref[...]).astype(o_ref.dtype)


# ---------------------------------------------------------------------------
# Fused fast path: whole (padded) feature map resident in VMEM; compute batch
# stats in-kernel, then BN/ReLU/1x1-conv without re-reading x from HBM.
# ---------------------------------------------------------------------------
def _fused_small_kernel(x_ref, gamma_ref, beta_ref, w_ref, b_ref, o_ref, *, inv_m):
    x = x_ref[...].astype(jnp.float32)                       # (N, C, HWp)
    xs = jnp.sum(x, axis=0)                                  # (C, HWp)
    xsq = jnp.sum(x * x, axis=0)                             # (C, HWp)
    sums = jnp.sum(xs, axis=1, keepdims=True)                # (C, 1)
    sqs = jnp.sum(xsq, axis=1, keepdims=True)                # (C, 1)
    mean = sums * inv_m
    # NOTE: E[x^2]-E[x]^2 with f32 partials; clamp guards cancellation.  A
    # Welford/shifted variance would be more robust for extreme-scale inputs.
    var = jnp.maximum(sqs * inv_m - mean * mean, 0.0)
    scale = gamma_ref[...] * jax.lax.rsqrt(var + EPS)        # (C, 1)
    shift = beta_ref[...] - mean * scale                     # (C, 1)
    w = w_ref[...]                                           # (O, C)
    b = b_ref[...]                                           # (O, 1)
    for n in range(x_ref.shape[0]):                          # N is small here
        y = jnp.maximum(x[n] * scale + shift, 0.0)           # (C, HWp)
        o_ref[n] = (jnp.dot(w, y, preferred_element_type=jnp.float32)
                    + b).astype(o_ref.dtype)


def _pick_tile(hw_pad, target):
    """Largest multiple of 128 that divides hw_pad and is <= target.
    hw_pad is always a multiple of 128, so this never exceeds the target."""
    if hw_pad <= target:
        return hw_pad
    t = (target // 128) * 128
    while t >= 128:
        if hw_pad % t == 0:
            return t
        t -= 128
    return 128


def _pick_split(n_tiles):
    """Split the spatial tiles into P parallel chunks (megacore at N=1 on v7x,
    shorter sequential accumulation chains for the f32 sums)."""
    for p in (8, 4, 2):
        if n_tiles % p == 0:
            return p
    return 1


# ---------------------------------------------------------------------------
# Wrapper
# ---------------------------------------------------------------------------
@functools.partial(jax.jit, static_argnames=("tm", "max_fused_bytes"))
def swiftnet_forward(features, gamma, beta, conv_w, conv_b, *,
                     tm=8192, max_fused_bytes=8 * 1024 * 1024):
    """features: (N, 128, H, W) NCHW -> logits (N, num_classes, H, W) float32."""
    N, C, H, W = features.shape
    assert C == C_IN
    num_classes = conv_w.shape[0]

    HW = H * W
    M = N * HW
    inv_m = 1.0 / M
    HW_pad = ((HW + 127) // 128) * 128          # lane-dense spatial extent

    # Free reshape (contiguous); pad spatial axis only if needed. Padded zeros
    # contribute nothing to the BN sums (we divide by the true M) and the
    # corresponding logit columns are sliced off at the end.
    x = features.reshape(N, C, HW)
    if HW_pad != HW:
        x = jnp.pad(x, ((0, 0), (0, 0), (0, HW_pad - HW)))

    w = conv_w.reshape(num_classes, C).astype(jnp.float32)      # (O, C)
    b = conv_b.reshape(num_classes, 1).astype(jnp.float32)      # (O, 1)
    g2 = gamma.reshape(C, 1).astype(jnp.float32)
    be2 = beta.reshape(C, 1).astype(jnp.float32)

    x_bytes = N * C * HW_pad * x.dtype.itemsize
    out_bytes = N * num_classes * HW_pad * 4

    if N <= 16 and (x_bytes + out_bytes) <= max_fused_bytes:
        # -------- fused fast path: x read from HBM exactly once --------
        out = pl.pallas_call(
            functools.partial(_fused_small_kernel, inv_m=inv_m),
            out_shape=jax.ShapeDtypeStruct((N, num_classes, HW_pad), jnp.float32),
        )(x, g2, be2, w, b)
    else:
        # -------- two-pass path --------
        t = _pick_tile(HW_pad, tm)
        n_tiles = HW_pad // t
        P = _pick_split(n_tiles)
        inner = n_tiles // P

        # Pass 1: per-(batch, chunk) partial BN statistics.
        part_sum, part_sq = pl.pallas_call(
            _stats_kernel,
            out_shape=(jax.ShapeDtypeStruct((N, P, C, 1), jnp.float32),
                       jax.ShapeDtypeStruct((N, P, C, 1), jnp.float32)),
            grid=(N, P, inner),
            in_specs=[pl.BlockSpec((1, C, t),
                                   lambda n, p, j: (n, 0, p * inner + j))],
            out_specs=(pl.BlockSpec((1, 1, C, 1), lambda n, p, j: (n, p, 0, 0)),
                       pl.BlockSpec((1, 1, C, 1), lambda n, p, j: (n, p, 0, 0))),
            compiler_params=pltpu.CompilerParams(
                dimension_semantics=("parallel", "parallel", "arbitrary"),
                vmem_limit_bytes=32 * 1024 * 1024),
        )(x)

        # Fold stats + affine into scale/shift once (tiny 128-element math).
        sums = jnp.sum(part_sum[:, :, :, 0], axis=(0, 1))       # (C,)
        sqs = jnp.sum(part_sq[:, :, :, 0], axis=(0, 1))         # (C,)
        mean = sums * inv_m
        var = jnp.maximum(sqs * inv_m - mean * mean, 0.0)       # clamp cancellation
        scale = gamma.astype(jnp.float32) * jax.lax.rsqrt(var + EPS)
        shift = beta.astype(jnp.float32) - mean * scale
        scale2 = scale.reshape(C, 1)
        shift2 = shift.reshape(C, 1)

        # Pass 2: fused BN/ReLU/1x1-conv; output written directly as N,C,(HW),
        # no class padding, lane-dense stores.
        out = pl.pallas_call(
            _bn_relu_conv1x1_kernel,
            out_shape=jax.ShapeDtypeStruct((N, num_classes, HW_pad), jnp.float32),
            grid=(N, n_tiles),
            in_specs=[pl.BlockSpec((1, C, t), lambda n, j: (n, 0, j)),
                      pl.BlockSpec((C, 1), lambda n, j: (0, 0)),
                      pl.BlockSpec((C, 1), lambda n, j: (0, 0)),
                      pl.BlockSpec((num_classes, C), lambda n, j: (0, 0)),
                      pl.BlockSpec((num_classes, 1), lambda n, j: (0, 0))],
            out_specs=pl.BlockSpec((1, num_classes, t), lambda n, j: (n, 0, j)),
            compiler_params=pltpu.CompilerParams(
                dimension_semantics=("parallel", "parallel"),
                vmem_limit_bytes=32 * 1024 * 1024),
        )(x, scale2, shift2, w, b)

    if HW_pad != HW:
        out = out[:, :, :HW]
    return out.reshape(N, num_classes, H, W)


# ---------------------------------------------------------------------------
# Pure-JAX reference (mirrors PyTorch train-mode BN -> ReLU -> 1x1 conv)
# ---------------------------------------------------------------------------
def reference_forward(features, gamma, beta, conv_w, conv_b):
    x = features.astype(jnp.float32)
    mean = jnp.mean(x, axis=(0, 2, 3), keepdims=True)
    var = jnp.mean((x - mean) ** 2, axis=(0, 2, 3), keepdims=True)   # biased
    y = (x - mean) / jnp.sqrt(var + EPS)
    y = y * gamma.reshape(1, -1, 1, 1) + beta.reshape(1, -1, 1, 1)
    y = jnp.maximum(y, 0.0)
    w2d = conv_w.reshape(conv_w.shape[0], -1)                        # (O, C)
    out = jnp.einsum("nchw,oc->nohw", y, w2d) + conv_b.reshape(1, -1, 1, 1)
    return out


if __name__ == "__main__":
    key = jax.random.PRNGKey(0)
    k0, k1, k2, k3, k4, k5 = jax.random.split(key, 6)

    num_classes = 19

    # Synthetic parameters (shapes follow _BNReluConv(128, num_classes, k=1, bias=True)).
    gamma = 1.0 + 0.1 * jax.random.normal(k1, (C_IN,), dtype=jnp.float32)   # BN weight
    beta = 0.1 * jax.random.normal(k2, (C_IN,), dtype=jnp.float32)          # BN bias
    conv_w = 0.05 * jax.random.normal(k3, (num_classes, C_IN, 1, 1), dtype=jnp.float32)
    conv_b = 0.1 * jax.random.normal(k4, (num_classes,), dtype=jnp.float32)

    def check(features, **kw):
        out = jax.block_until_ready(
            swiftnet_forward(features, gamma, beta, conv_w, conv_b, **kw))
        ref = reference_forward(features, gamma, beta, conv_w, conv_b)
        assert out.shape == ref.shape, (out.shape, ref.shape)
        max_err = float(jnp.max(jnp.abs(out - ref)))
        assert jnp.allclose(out, ref, rtol=1e-4, atol=1e-3), max_err

    # 2 x 128 x 16 x 16 features -> fused fast path (single HBM read of x).
    feats = jax.random.normal(k0, (2, C_IN, 16, 16), dtype=jnp.float32)
    check(feats)

    # Force the two-pass tiled path (stats grid + fused BN/ReLU/conv grid).
    check(feats, max_fused_bytes=0, tm=128)

    # Non-128-divisible spatial extent (15x15 = 225 -> padded to 256): both paths.
    feats_odd = jax.random.normal(k5, (2, C_IN, 15, 15), dtype=jnp.float32)
    check(feats_odd)
    check(feats_odd, max_fused_bytes=0, tm=128)

    print("KERNEL_OK")
</pallas_src>

<mosaic_0001>
module attributes {stable_mosaic.version = 11 : i64} {
  func.func @_fused_small_kernel(%arg0: memref<2x128x256xf32, #tpu.memory_space<vmem>>, %arg1: memref<128x1xf32, #tpu.memory_space<vmem>>, %arg2: memref<128x1xf32, #tpu.memory_space<vmem>>, %arg3: memref<19x128xf32, #tpu.memory_space<vmem>>, %arg4: memref<19x1xf32, #tpu.memory_space<vmem>>, %arg5: memref<2x19x256xf32, #tpu.memory_space<vmem>>) attributes {dimension_semantics = [], scalar_prefetch = 0 : i64, scratch_operands = 0 : i64, tpu.core_type = #tpu.core_type<tc>} {
    %c0 = arith.constant 0 : index
    %c0_0 = arith.constant 0 : index
    %c0_1 = arith.constant 0 : index
    %0 = vector.load %arg0[%c0, %c0_0, %c0_1] : memref<2x128x256xf32, #tpu.memory_space<vmem>>, vector<2x128x256xf32>
    %cst = arith.constant dense<0.000000e+00> : vector<128x256xf32>
    %1 = vector.multi_reduction <add>, %0, %cst [0] : vector<2x128x256xf32> to vector<128x256xf32>
    %2 = arith.mulf %0, %0 : vector<2x128x256xf32>
    %cst_2 = arith.constant dense<0.000000e+00> : vector<128x256xf32>
    %3 = vector.multi_reduction <add>, %2, %cst_2 [0] : vector<2x128x256xf32> to vector<128x256xf32>
    %cst_3 = arith.constant dense<0.000000e+00> : vector<128xf32>
    %4 = vector.multi_reduction <add>, %1, %cst_3 [1] : vector<128x256xf32> to vector<128xf32>
    %5 = vector.shape_cast %4 : vector<128xf32> to vector<128x1xf32>
    %cst_4 = arith.constant dense<0.000000e+00> : vector<128xf32>
    %6 = vector.multi_reduction <add>, %3, %cst_4 [1] : vector<128x256xf32> to vector<128xf32>
    %7 = vector.shape_cast %6 : vector<128xf32> to vector<128x1xf32>
    %cst_5 = arith.constant 0.001953125 : f32
    %8 = vector.broadcast %cst_5 : f32 to vector<128x1xf32>
    %9 = arith.mulf %5, %8 : vector<128x1xf32>
    %cst_6 = arith.constant 0.001953125 : f32
    %10 = vector.broadcast %cst_6 : f32 to vector<128x1xf32>
    %11 = arith.mulf %7, %10 : vector<128x1xf32>
    %12 = arith.mulf %9, %9 : vector<128x1xf32>
    %13 = arith.subf %11, %12 : vector<128x1xf32>
    %cst_7 = arith.constant 0.000000e+00 : f32
    %14 = vector.broadcast %cst_7 : f32 to vector<128x1xf32>
    %15 = arith.maximumf %13, %14 : vector<128x1xf32>
    %c0_8 = arith.constant 0 : index
    %c0_9 = arith.constant 0 : index
    %16 = vector.load %arg1[%c0_8, %c0_9] : memref<128x1xf32, #tpu.memory_space<vmem>>, vector<128x1xf32>
    %cst_10 = arith.constant 9.99999974E-6 : f32
    %17 = vector.broadcast %cst_10 : f32 to vector<128x1xf32>
    %18 = arith.addf %15, %17 : vector<128x1xf32>
    %19 = math.rsqrt %18 : vector<128x1xf32>
    %20 = arith.mulf %16, %19 : vector<128x1xf32>
    %c0_11 = arith.constant 0 : index
    %c0_12 = arith.constant 0 : index
    %21 = vector.load %arg2[%c0_11, %c0_12] : memref<128x1xf32, #tpu.memory_space<vmem>>, vector<128x1xf32>
    %22 = arith.mulf %9, %20 : vector<128x1xf32>
    %23 = arith.subf %21, %22 : vector<128x1xf32>
    %c0_13 = arith.constant 0 : index
    %c0_14 = arith.constant 0 : index
    %24 = vector.load %arg3[%c0_13, %c0_14] : memref<19x128xf32, #tpu.memory_space<vmem>>, vector<19x128xf32>
    %c0_15 = arith.constant 0 : index
    %c0_16 = arith.constant 0 : index
    %25 = vector.load %arg4[%c0_15, %c0_16] : memref<19x1xf32, #tpu.memory_space<vmem>>, vector<19x1xf32>
    %26 = vector.extract_strided_slice %0 {offsets = [0, 0, 0], sizes = [1, 128, 256], strides = [1, 1, 1]} : vector<2x128x256xf32> to vector<1x128x256xf32>
    %27 = vector.shape_cast %26 : vector<1x128x256xf32> to vector<128x256xf32>
    %28 = vector.broadcast %20 : vector<128x1xf32> to vector<128x256xf32>
    %29 = arith.mulf %27, %28 : vector<128x256xf32>
    %30 = vector.broadcast %23 : vector<128x1xf32> to vector<128x256xf32>
    %31 = arith.addf %29, %30 : vector<128x256xf32>
    %cst_17 = arith.constant 0.000000e+00 : f32
    %32 = vector.broadcast %cst_17 : f32 to vector<128x256xf32>
    %33 = arith.maximumf %31, %32 : vector<128x256xf32>
    %cst_18 = arith.constant dense<0.000000e+00> : vector<19x256xf32>
    %34 = tpu.matmul %24, %33, %cst_18 {dimension_numbers = #tpu.dot_dimension_numbers<[1], [0], [0], [1], [0, 0, 1, 1], [], []>} : vector<19x128xf32>, vector<128x256xf32>, vector<19x256xf32> -> vector<19x256xf32>
    %35 = vector.broadcast %25 : vector<19x1xf32> to vector<19x256xf32>
    %36 = arith.addf %34, %35 : vector<19x256xf32>
    %c0_19 = arith.constant 0 : index
    %c0_20 = arith.constant 0 : index
    %c0_21 = arith.constant 0 : index
    %37 = vector.load %arg5[%c0_19, %c0_20, %c0_21] : memref<2x19x256xf32, #tpu.memory_space<vmem>>, vector<1x19x256xf32>
    %38 = vector.shape_cast %37 : vector<1x19x256xf32> to vector<19x256xf32>
    %39 = vector.shape_cast %36 : vector<19x256xf32> to vector<1x19x256xf32>
    tpu.vector_store %arg5[%c0_19, %c0_20, %c0_21], %39 {strides = array<i32>} : memref<2x19x256xf32, #tpu.memory_space<vmem>>, vector<1x19x256xf32>,
    %40 = vector.extract_strided_slice %0 {offsets = [1, 0, 0], sizes = [1, 128, 256], strides = [1, 1, 1]} : vector<2x128x256xf32> to vector<1x128x256xf32>
    %41 = vector.shape_cast %40 : vector<1x128x256xf32> to vector<128x256xf32>
    %42 = vector.broadcast %20 : vector<128x1xf32> to vector<128x256xf32>
    %43 = arith.mulf %41, %42 : vector<128x256xf32>
    %44 = vector.broadcast %23 : vector<128x1xf32> to vector<128x256xf32>
    %45 = arith.addf %43, %44 : vector<128x256xf32>
    %cst_22 = arith.constant 0.000000e+00 : f32
    %46 = vector.broadcast %cst_22 : f32 to vector<128x256xf32>
    %47 = arith.maximumf %45, %46 : vector<128x256xf32>
    %cst_23 = arith.constant dense<0.000000e+00> : vector<19x256xf32>
    %48 = tpu.matmul %24, %47, %cst_23 {dimension_numbers = #tpu.dot_dimension_numbers<[1], [0], [0], [1], [0, 0, 1, 1], [], []>} : vector<19x128xf32>, vector<128x256xf32>, vector<19x256xf32> -> vector<19x256xf32>
    %49 = vector.broadcast %25 : vector<19x1xf32> to vector<19x256xf32>
    %50 = arith.addf %48, %49 : vector<19x256xf32>
    %c1 = arith.constant 1 : index
    %c0_24 = arith.constant 0 : index
    %c0_25 = arith.constant 0 : index
    %51 = vector.load %arg5[%c1, %c0_24, %c0_25] : memref<2x19x256xf32, #tpu.memory_space<vmem>>, vector<1x19x256xf32>
    %52 = vector.shape_cast %51 : vector<1x19x256xf32> to vector<19x256xf32>
    %53 = vector.shape_cast %50 : vector<19x256xf32> to vector<1x19x256xf32>
    tpu.vector_store %arg5[%c1, %c0_24, %c0_25], %53 {strides = array<i32>} : memref<2x19x256xf32, #tpu.memory_space<vmem>>, vector<1x19x256xf32>,
    return
  }
}

</mosaic_0001>

<llo_original>
// kernel: swiftnet_forward.1
$region0: #{swiftnet_forward.1}
  #allocation0 [shape = 'u32[]', space=smem, size = 0x4, offset = 0x4, fixed_abs, tag = 'smem constant byte address 0x4 - core index']
  #allocation1 [shape = 'u32[144,128]{1,0:T(1,128)}', space=vmem, size = 0x12000, scoped, tag = 'internal scratch']
  %s0 = inlined_call_operand.vmem [shape: f32[2,128,256], index: 0, kind: input, shape index: {}]
  %s1 = inlined_call_operand.vmem [shape: f32[128,1], index: 1, kind: input, shape index: {}]
  %s2 = inlined_call_operand.vmem [shape: f32[128,1], index: 2, kind: input, shape index: {}]
  %s3 = inlined_call_operand.vmem [shape: f32[19,128], index: 3, kind: input, shape index: {}]
  %s4 = inlined_call_operand.vmem [shape: f32[19,1], index: 4, kind: input, shape index: {}]
  %s5 = inlined_call_operand.vmem [shape: f32[2,19,256], index: 5, kind: output, shape index: {}]
  %s6 = sld [smem:[#allocation0]]
  $region30: #{swiftnet_forward.1} parent=0
    _
  %s8 = ssub.s32 1, %s6
  %s9 = scalar_select 0, %s8, %s6
  // Predicated region
  $region2: #{swiftnet_forward.1} parent=0 // pred_check
    _
  $region3: #{swiftnet_forward.1} parent=0 // pred_check_branch
    %11 = sbr.rel (0) target = $region5
  $region4: #{swiftnet_forward.1} parent=0 // pred_region
    _
  $region5: #{swiftnet_forward.1} parent=0 // pred_fallthru
    _
  // Predicated region
  $region6: #{swiftnet_forward.1} parent=0 // pred_check
    _
  $region7: #{swiftnet_forward.1} parent=0 // pred_check_branch
    %13 = sbr.rel (0) target = $region9
  $region8: #{swiftnet_forward.1} parent=0 // pred_region
    _
  $region9: #{swiftnet_forward.1} parent=0 // pred_fallthru
    _
  // Predicated region
  $region10: #{swiftnet_forward.1} parent=0 // pred_check
    _
  $region11: #{swiftnet_forward.1} parent=0 // pred_check_branch
    %15 = sbr.rel (0) target = $region13
  $region12: #{swiftnet_forward.1} parent=0 // pred_region
    _
  $region13: #{swiftnet_forward.1} parent=0 // pred_fallthru
    _
  // Predicated region
  $region14: #{swiftnet_forward.1} parent=0 // pred_check
    _
  $region15: #{swiftnet_forward.1} parent=0 // pred_check_branch
    %17 = sbr.rel (0) target = $region17
  $region16: #{swiftnet_forward.1} parent=0 // pred_region
    _
  $region17: #{swiftnet_forward.1} parent=0 // pred_fallthru
    _
  // Predicated region
  $region18: #{swiftnet_forward.1} parent=0 // pred_check
    _
  $region19: #{swiftnet_forward.1} parent=0 // pred_check_branch
    %19 = sbr.rel (0) target = $region21
  $region20: #{swiftnet_forward.1} parent=0 // pred_region
    _
  $region21: #{swiftnet_forward.1} parent=0 // pred_fallthru
    _
  %v20 = vld [vmem:[%s0] sm:$0xff]
  %v21 = vld [vmem:[%s0 + $0x8] sm:$0xff]
  %v22 = vld [vmem:[%s0 + $0x10] sm:$0xff]
  %v23 = vld [vmem:[%s0 + $0x18] sm:$0xff]
  %v24 = vld [vmem:[%s0 + $0x20] sm:$0xff]
  %v25 = vld [vmem:[%s0 + $0x28] sm:$0xff]
  %v26 = vld [vmem:[%s0 + $0x30] sm:$0xff]
  %v27 = vld [vmem:[%s0 + $0x38] sm:$0xff]
  %v28 = vld [vmem:[%s0 + $0x40] sm:$0xff]
  %v29 = vld [vmem:[%s0 + $0x48] sm:$0xff]
  %v30 = vld [vmem:[%s0 + $0x50] sm:$0xff]
  %v31 = vld [vmem:[%s0 + $0x58] sm:$0xff]
  %v32 = vld [vmem:[%s0 + $0x60] sm:$0xff]
  %v33 = vld [vmem:[%s0 + $0x68] sm:$0xff]
  %v34 = vld [vmem:[%s0 + $0x70] sm:$0xff]
  %v35 = vld [vmem:[%s0 + $0x78] sm:$0xff]
  %v36 = vld [vmem:[%s0 + $0x80] sm:$0xff]
  %v37 = vld [vmem:[%s0 + $0x88] sm:$0xff]
  %v38 = vld [vmem:[%s0 + $0x90] sm:$0xff]
  %v39 = vld [vmem:[%s0 + $0x98] sm:$0xff]
  %v40 = vld [vmem:[%s0 + $0xa0] sm:$0xff]
  %v41 = vld [vmem:[%s0 + $0xa8] sm:$0xff]
  %v42 = vld [vmem:[%s0 + $0xb0] sm:$0xff]
  %v43 = vld [vmem:[%s0 + $0xb8] sm:$0xff]
  %v44 = vld [vmem:[%s0 + $0xc0] sm:$0xff]
  %v45 = vld [vmem:[%s0 + $0xc8] sm:$0xff]
  %v46 = vld [vmem:[%s0 + $0xd0] sm:$0xff]
  %v47 = vld [vmem:[%s0 + $0xd8] sm:$0xff]
  %v48 = vld [vmem:[%s0 + $0xe0] sm:$0xff]
  %v49 = vld [vmem:[%s0 + $0xe8] sm:$0xff]
  %v50 = vld [vmem:[%s0 + $0xf0] sm:$0xff]
  %v51 = vld [vmem:[%s0 + $0xf8] sm:$0xff]
  %v52 = vld [vmem:[%s0 + $0x100] sm:$0xff]
  %v53 = vld [vmem:[%s0 + $0x108] sm:$0xff]
  %v54 = vld [vmem:[%s0 + $0x110] sm:$0xff]
  %v55 = vld [vmem:[%s0 + $0x118] sm:$0xff]
  %v56 = vld [vmem:[%s0 + $0x120] sm:$0xff]
  %v57 = vld [vmem:[%s0 + $0x128] sm:$0xff]
  %v58 = vld [vmem:[%s0 + $0x130] sm:$0xff]
  %v59 = vld [vmem:[%s0 + $0x138] sm:$0xff]
  %v60 = vld [vmem:[%s0 + $0x140] sm:$0xff]
  %v61 = vld [vmem:[%s0 + $0x148] sm:$0xff]
  %v62 = vld [vmem:[%s0 + $0x150] sm:$0xff]
  %v63 = vld [vmem:[%s0 + $0x158] sm:$0xff]
  %v64 = vld [vmem:[%s0 + $0x160] sm:$0xff]
  %v65 = vld [vmem:[%s0 + $0x168] sm:$0xff]
  %v66 = vld [vmem:[%s0 + $0x170] sm:$0xff]
  %v67 = vld [vmem:[%s0 + $0x178] sm:$0xff]
  %v68 = vld [vmem:[%s0 + $0x180] sm:$0xff]
  %v69 = vld [vmem:[%s0 + $0x188] sm:$0xff]
  %v70 = vld [vmem:[%s0 + $0x190] sm:$0xff]
  %v71 = vld [vmem:[%s0 + $0x198] sm:$0xff]
  %v72 = vld [vmem:[%s0 + $0x1a0] sm:$0xff]
  %v73 = vld [vmem:[%s0 + $0x1a8] sm:$0xff]
  %v74 = vld [vmem:[%s0 + $0x1b0] sm:$0xff]
  %v75 = vld [vmem:[%s0 + $0x1b8] sm:$0xff]
  %v76 = vld [vmem:[%s0 + $0x1c0] sm:$0xff]
  %v77 = vld [vmem:[%s0 + $0x1c8] sm:$0xff]
  %v78 = vld [vmem:[%s0 + $0x1d0] sm:$0xff]
  %v79 = vld [vmem:[%s0 + $0x1d8] sm:$0xff]
  %v80 = vld [vmem:[%s0 + $0x1e0] sm:$0xff]
  %v81 = vld [vmem:[%s0 + $0x1e8] sm:$0xff]
  %v82 = vld [vmem:[%s0 + $0x1f0] sm:$0xff]
  %v83 = vld [vmem:[%s0 + $0x1f8] sm:$0xff]
  %v84 = vadd.f32 %v20, %v52
  %v85 = vadd.f32 %v21, %v53
  %v86 = vadd.f32 %v22, %v54
  %v87 = vadd.f32 %v23, %v55
  %v88 = vadd.f32 %v24, %v56
  %v89 = vadd.f32 %v25, %v57
  %v90 = vadd.f32 %v26, %v58
  %v91 = vadd.f32 %v27, %v59
  %v92 = vadd.f32 %v28, %v60
  %v93 = vadd.f32 %v29, %v61
  %v94 = vadd.f32 %v30, %v62
  %v95 = vadd.f32 %v31, %v63
  %v96 = vadd.f32 %v32, %v64
  %v97 = vadd.f32 %v33, %v65
  %v98 = vadd.f32 %v34, %v66
  %v99 = vadd.f32 %v35, %v67
  %v100 = vadd.f32 %v36, %v68
  %v101 = vadd.f32 %v37, %v69
  %v102 = vadd.f32 %v38, %v70
  %v103 = vadd.f32 %v39, %v71
  %v104 = vadd.f32 %v40, %v72
  %v105 = vadd.f32 %v41, %v73
  %v106 = vadd.f32 %v42, %v74
  %v107 = vadd.f32 %v43, %v75
  %v108 = vadd.f32 %v44, %v76
  %v109 = vadd.f32 %v45, %v77
  %v110 = vadd.f32 %v46, %v78
  %v111 = vadd.f32 %v47, %v79
  %v112 = vadd.f32 %v48, %v80
  %v113 = vadd.f32 %v49, %v81
  %v114 = vadd.f32 %v50, %v82
  %v115 = vadd.f32 %v51, %v83
  %v116 = vmul.f32 %v20, %v20
  %v117 = vmul.f32 %v21, %v21
  %v118 = vmul.f32 %v22, %v22
  %v119 = vmul.f32 %v23, %v23
  %v120 = vmul.f32 %v24, %v24
  %v121 = vmul.f32 %v25, %v25
  %v122 = vmul.f32 %v26, %v26
  %v123 = vmul.f32 %v27, %v27
  %v124 = vmul.f32 %v28, %v28
  %v125 = vmul.f32 %v29, %v29
  %v126 = vmul.f32 %v30, %v30
  %v127 = vmul.f32 %v31, %v31
  %v128 = vmul.f32 %v32, %v32
  %v129 = vmul.f32 %v33, %v33
  %v130 = vmul.f32 %v34, %v34
  %v131 = vmul.f32 %v35, %v35
  %v132 = vmul.f32 %v36, %v36
  %v133 = vmul.f32 %v37, %v37
  %v134 = vmul.f32 %v38, %v38
  %v135 = vmul.f32 %v39, %v39
  %v136 = vmul.f32 %v40, %v40
  %v137 = vmul.f32 %v41, %v41
  %v138 = vmul.f32 %v42, %v42
  %v139 = vmul.f32 %v43, %v43
  %v140 = vmul.f32 %v44, %v44
  %v141 = vmul.f32 %v45, %v45
  %v142 = vmul.f32 %v46, %v46
  %v143 = vmul.f32 %v47, %v47
  %v144 = vmul.f32 %v48, %v48
  %v145 = vmul.f32 %v49, %v49
  %v146 = vmul.f32 %v50, %v50
  %v147 = vmul.f32 %v51, %v51
  %v148 = vmul.f32 %v52, %v52
  %v149 = vmul.f32 %v53, %v53
  %v150 = vmul.f32 %v54, %v54
  %v151 = vmul.f32 %v55, %v55
  %v152 = vmul.f32 %v56, %v56
  %v153 = vmul.f32 %v57, %v57
  %v154 = vmul.f32 %v58, %v58
  %v155 = vmul.f32 %v59, %v59
  %v156 = vmul.f32 %v60, %v60
  %v157 = vmul.f32 %v61, %v61
  %v158 = vmul.f32 %v62, %v62
  %v159 = vmul.f32 %v63, %v63
  %v160 = vmul.f32 %v64, %v64
  %v161 = vmul.f32 %v65, %v65
  %v162 = vmul.f32 %v66, %v66
  %v163 = vmul.f32 %v67, %v67
  %v164 = vmul.f32 %v68, %v68
  %v165 = vmul.f32 %v69, %v69
  %v166 = vmul.f32 %v70, %v70
  %v167 = vmul.f32 %v71, %v71
  %v168 = vmul.f32 %v72, %v72
  %v169 = vmul.f32 %v73, %v73
  %v170 = vmul.f32 %v74, %v74
  %v171 = vmul.f32 %v75, %v75
  %v172 = vmul.f32 %v76, %v76
  %v173 = vmul.f32 %v77, %v77
  %v174 = vmul.f32 %v78, %v78
  %v175 = vmul.f32 %v79, %v79
  %v176 = vmul.f32 %v80, %v80
  %v177 = vmul.f32 %v81, %v81
  %v178 = vmul.f32 %v82, %v82
  %v179 = vmul.f32 %v83, %v83
  %v180 = vadd.f32 %v116, %v148
  %v181 = vadd.f32 %v117, %v149
  %v182 = vadd.f32 %v118, %v150
  %v183 = vadd.f32 %v119, %v151
  %v184 = vadd.f32 %v120, %v152
  %v185 = vadd.f32 %v121, %v153
  %v186 = vadd.f32 %v122, %v154
  %v187 = vadd.f32 %v123, %v155
  %v188 = vadd.f32 %v124, %v156
  %v189 = vadd.f32 %v125, %v157
  %v190 = vadd.f32 %v126, %v158
  %v191 = vadd.f32 %v127, %v159
  %v192 = vadd.f32 %v128, %v160
  %v193 = vadd.f32 %v129, %v161
  %v194 = vadd.f32 %v130, %v162
  %v195 = vadd.f32 %v131, %v163
  %v196 = vadd.f32 %v132, %v164
  %v197 = vadd.f32 %v133, %v165
  %v198 = vadd.f32 %v134, %v166
  %v199 = vadd.f32 %v135, %v167
  %v200 = vadd.f32 %v136, %v168
  %v201 = vadd.f32 %v137, %v169
  %v202 = vadd.f32 %v138, %v170
  %v203 = vadd.f32 %v139, %v171
  %v204 = vadd.f32 %v140, %v172
  %v205 = vadd.f32 %v141, %v173
  %v206 = vadd.f32 %v142, %v174
  %v207 = vadd.f32 %v143, %v175
  %v208 = vadd.f32 %v144, %v176
  %v209 = vadd.f32 %v145, %v177
  %v210 = vadd.f32 %v146, %v178
  %v211 = vadd.f32 %v147, %v179
  %v212 = vadd.f32 %v84, %v85
  %213 = vadd.xlane.f32.xlu0 %v212
  %v214 = vpop.xlane.xlu0 %213
  %v215 = vadd.f32 %v86, %v87
  %216 = vadd.xlane.f32.xlu0 %v215
  %v217 = vpop.xlane.xlu0 %216
  %v218 = vadd.f32 %v88, %v89
  %219 = vadd.xlane.f32.xlu0 %v218
  %v220 = vpop.xlane.xlu0 %219
  %v221 = vadd.f32 %v90, %v91
  %222 = vadd.xlane.f32.xlu0 %v221
  %v223 = vpop.xlane.xlu0 %222
  %v224 = vadd.f32 %v92, %v93
  %225 = vadd.xlane.f32.xlu0 %v224
  %v226 = vpop.xlane.xlu0 %225
  %v227 = vadd.f32 %v94, %v95
  %228 = vadd.xlane.f32.xlu0 %v227
  %v229 = vpop.xlane.xlu0 %228
  %v230 = vadd.f32 %v96, %v97
  %231 = vadd.xlane.f32.xlu0 %v230
  %v232 = vpop.xlane.xlu0 %231
  %v233 = vadd.f32 %v98, %v99
  %234 = vadd.xlane.f32.xlu0 %v233
  %v235 = vpop.xlane.xlu0 %234
  %v236 = vadd.f32 %v100, %v101
  %237 = vadd.xlane.f32.xlu0 %v236
  %v238 = vpop.xlane.xlu0 %237
  %v239 = vadd.f32 %v102, %v103
  %240 = vadd.xlane.f32.xlu0 %v239
  %v241 = vpop.xlane.xlu0 %240
  %v242 = vadd.f32 %v104, %v105
  %243 = vadd.xlane.f32.xlu0 %v242
  %v244 = vpop.xlane.xlu0 %243
  %v245 = vadd.f32 %v106, %v107
  %246 = vadd.xlane.f32.xlu0 %v245
  %v247 = vpop.xlane.xlu0 %246
  %v248 = vadd.f32 %v108, %v109
  %249 = vadd.xlane.f32.xlu0 %v248
  %v250 = vpop.xlane.xlu0 %249
  %v251 = vadd.f32 %v110, %v111
  %252 = vadd.xlane.f32.xlu0 %v251
  %v253 = vpop.xlane.xlu0 %252
  %v254 = vadd.f32 %v112, %v113
  %255 = vadd.xlane.f32.xlu0 %v254
  %v256 = vpop.xlane.xlu0 %255
  %v257 = vadd.f32 %v114, %v115
  %258 = vadd.xlane.f32.xlu0 %v257
  %v259 = vpop.xlane.xlu0 %258
  %v260 = vadd.f32 %v180, %v181
  %261 = vadd.xlane.f32.xlu0 %v260
  %v262 = vpop.xlane.xlu0 %261
  %v263 = vadd.f32 %v182, %v183
  %264 = vadd.xlane.f32.xlu0 %v263
  %v265 = vpop.xlane.xlu0 %264
  %v266 = vadd.f32 %v184, %v185
  %267 = vadd.xlane.f32.xlu0 %v266
  %v268 = vpop.xlane.xlu0 %267
  %v269 = vadd.f32 %v186, %v187
  %270 = vadd.xlane.f32.xlu0 %v269
  %v271 = vpop.xlane.xlu0 %270
  %v272 = vadd.f32 %v188, %v189
  %273 = vadd.xlane.f32.xlu0 %v272
  %v274 = vpop.xlane.xlu0 %273
  %v275 = vadd.f32 %v190, %v191
  %276 = vadd.xlane.f32.xlu0 %v275
  %v277 = vpop.xlane.xlu0 %276
  %v278 = vadd.f32 %v192, %v193
  %279 = vadd.xlane.f32.xlu0 %v278
  %v280 = vpop.xlane.xlu0 %279
  %v281 = vadd.f32 %v194, %v195
  %282 = vadd.xlane.f32.xlu0 %v281
  %v283 = vpop.xlane.xlu0 %282
  %v284 = vadd.f32 %v196, %v197
  %285 = vadd.xlane.f32.xlu0 %v284
  %v286 = vpop.xlane.xlu0 %285
  %v287 = vadd.f32 %v198, %v199
  %288 = vadd.xlane.f32.xlu0 %v287
  %v289 = vpop.xlane.xlu0 %288
  %v290 = vadd.f32 %v200, %v201
  %291 = vadd.xlane.f32.xlu0 %v290
  %v292 = vpop.xlane.xlu0 %291
  %v293 = vadd.f32 %v202, %v203
  %294 = vadd.xlane.f32.xlu0 %v293
  %v295 = vpop.xlane.xlu0 %294
  %v296 = vadd.f32 %v204, %v205
  %297 = vadd.xlane.f32.xlu0 %v296
  %v298 = vpop.xlane.xlu0 %297
  %v299 = vadd.f32 %v206, %v207
  %300 = vadd.xlane.f32.xlu0 %v299
  %v301 = vpop.xlane.xlu0 %300
  %v302 = vadd.f32 %v208, %v209
  %303 = vadd.xlane.f32.xlu0 %v302
  %v304 = vpop.xlane.xlu0 %303
  %v305 = vadd.f32 %v210, %v211
  %306 = vadd.xlane.f32.xlu0 %v305
  %v307 = vpop.xlane.xlu0 %306
  %v308 = vmul.f32 %v214, 0.001953125
  %v309 = vmul.f32 %v217, 0.001953125
  %v310 = vmul.f32 %v220, 0.001953125
  %v311 = vmul.f32 %v223, 0.001953125
  %v312 = vmul.f32 %v226, 0.001953125
  %v313 = vmul.f32 %v229, 0.001953125
  %v314 = vmul.f32 %v232, 0.001953125
  %v315 = vmul.f32 %v235, 0.001953125
  %v316 = vmul.f32 %v238, 0.001953125
  %v317 = vmul.f32 %v241, 0.001953125
  %v318 = vmul.f32 %v244, 0.001953125
  %v319 = vmul.f32 %v247, 0.001953125
  %v320 = vmul.f32 %v250, 0.001953125
  %v321 = vmul.f32 %v253, 0.001953125
  %v322 = vmul.f32 %v256, 0.001953125
  %v323 = vmul.f32 %v259, 0.001953125
  %v324 = vmul.f32 %v262, 0.001953125
  %v325 = vmul.f32 %v265, 0.001953125
  %v326 = vmul.f32 %v268, 0.001953125
  %v327 = vmul.f32 %v271, 0.001953125
  %v328 = vmul.f32 %v274, 0.001953125
  %v329 = vmul.f32 %v277, 0.001953125
  %v330 = vmul.f32 %v280, 0.001953125
  %v331 = vmul.f32 %v283, 0.001953125
  %v332 = vmul.f32 %v286, 0.001953125
  %v333 = vmul.f32 %v289, 0.001953125
  %v334 = vmul.f32 %v292, 0.001953125
  %v335 = vmul.f32 %v295, 0.001953125
  %v336 = vmul.f32 %v298, 0.001953125
  %v337 = vmul.f32 %v301, 0.001953125
  %v338 = vmul.f32 %v304, 0.001953125
  %v339 = vmul.f32 %v307, 0.001953125
  %v340 = vmul.f32 %v308, %v308
  %v341 = vmul.f32 %v309, %v309
  %v342 = vmul.f32 %v310, %v310
  %v343 = vmul.f32 %v311, %v311
  %v344 = vmul.f32 %v312, %v312
  %v345 = vmul.f32 %v313, %v313
  %v346 = vmul.f32 %v314, %v314
  %v347 = vmul.f32 %v315, %v315
  %v348 = vmul.f32 %v316, %v316
  %v349 = vmul.f32 %v317, %v317
  %v350 = vmul.f32 %v318, %v318
  %v351 = vmul.f32 %v319, %v319
  %v352 = vmul.f32 %v320, %v320
  %v353 = vmul.f32 %v321, %v321
  %v354 = vmul.f32 %v322, %v322
  %v355 = vmul.f32 %v323, %v323
  %v356 = vsub.f32 %v324, %v340
  %v357 = vsub.f32 %v325, %v341
  %v358 = vsub.f32 %v326, %v342
  %v359 = vsub.f32 %v327, %v343
  %v360 = vsub.f32 %v328, %v344
  %v361 = vsub.f32 %v329, %v345
  %v362 = vsub.f32 %v330, %v346
  %v363 = vsub.f32 %v331, %v347
  %v364 = vsub.f32 %v332, %v348
  %v365 = vsub.f32 %v333, %v349
  %v366 = vsub.f32 %v334, %v350
  %v367 = vsub.f32 %v335, %v351
  %v368 = vsub.f32 %v336, %v352
  %v369 = vsub.f32 %v337, %v353
  %v370 = vsub.f32 %v338, %v354
  %v371 = vsub.f32 %v339, %v355
  %v372 = vmax.f32 %v356, 0.0
  %v373 = vmax.f32 %v357, 0.0
  %v374 = vmax.f32 %v358, 0.0
  %v375 = vmax.f32 %v359, 0.0
  %v376 = vmax.f32 %v360, 0.0
  %v377 = vmax.f32 %v361, 0.0
  %v378 = vmax.f32 %v362, 0.0
  %v379 = vmax.f32 %v363, 0.0
  %v380 = vmax.f32 %v364, 0.0
  %v381 = vmax.f32 %v365, 0.0
  %v382 = vmax.f32 %v366, 0.0
  %v383 = vmax.f32 %v367, 0.0
  %v384 = vmax.f32 %v368, 0.0
  %v385 = vmax.f32 %v369, 0.0
  %v386 = vmax.f32 %v370, 0.0
  %v387 = vmax.f32 %v371, 0.0
  %v388 = vld [vmem:[%s1] sm:$0xff]
  %v389 = vld [vmem:[%s1 + $0x8] sm:$0xff]
  %v390 = vld [vmem:[%s1 + $0x10] sm:$0xff]
  %v391 = vld [vmem:[%s1 + $0x18] sm:$0xff]
  %v392 = vld [vmem:[%s1 + $0x20] sm:$0xff]
  %v393 = vld [vmem:[%s1 + $0x28] sm:$0xff]
  %v394 = vld [vmem:[%s1 + $0x30] sm:$0xff]
  %v395 = vld [vmem:[%s1 + $0x38] sm:$0xff]
  %v396 = vld [vmem:[%s1 + $0x40] sm:$0xff]
  %v397 = vld [vmem:[%s1 + $0x48] sm:$0xff]
  %v398 = vld [vmem:[%s1 + $0x50] sm:$0xff]
  %v399 = vld [vmem:[%s1 + $0x58] sm:$0xff]
  %v400 = vld [vmem:[%s1 + $0x60] sm:$0xff]
  %v401 = vld [vmem:[%s1 + $0x68] sm:$0xff]
  %v402 = vld [vmem:[%s1 + $0x70] sm:$0xff]
  %v403 = vld [vmem:[%s1 + $0x78] sm:$0xff]
  %v404 = vadd.f32 %v372, 1e-05
  %v405 = vadd.f32 %v373, 1e-05
  %v406 = vadd.f32 %v374, 1e-05
  %v407 = vadd.f32 %v375, 1e-05
  %v408 = vadd.f32 %v376, 1e-05
  %v409 = vadd.f32 %v377, 1e-05
  %v410 = vadd.f32 %v378, 1e-05
  %v411 = vadd.f32 %v379, 1e-05
  %v412 = vadd.f32 %v380, 1e-05
  %v413 = vadd.f32 %v381, 1e-05
  %v414 = vadd.f32 %v382, 1e-05
  %v415 = vadd.f32 %v383, 1e-05
  %v416 = vadd.f32 %v384, 1e-05
  %v417 = vadd.f32 %v385, 1e-05
  %v418 = vadd.f32 %v386, 1e-05
  %v419 = vadd.f32 %v387, 1e-05
  %v420 = vrsqrt.pop %v404
  %v421 = vrsqrt.pop %v405
  %v422 = vrsqrt.pop %v406
  %v423 = vrsqrt.pop %v407
  %v424 = vrsqrt.pop %v408
  %v425 = vrsqrt.pop %v409
  %v426 = vrsqrt.pop %v410
  %v427 = vrsqrt.pop %v411
  %v428 = vrsqrt.pop %v412
  %v429 = vrsqrt.pop %v413
  %v430 = vrsqrt.pop %v414
  %v431 = vrsqrt.pop %v415
  %v432 = vrsqrt.pop %v416
  %v433 = vrsqrt.pop %v417
  %v434 = vrsqrt.pop %v418
  %v435 = vrsqrt.pop %v419
  %v436 = vmul.f32 %v388, %v420
  %v437 = vmul.f32 %v389, %v421
  %v438 = vmul.f32 %v390, %v422
  %v439 = vmul.f32 %v391, %v423
  %v440 = vmul.f32 %v392, %v424
  %v441 = vmul.f32 %v393, %v425
  %v442 = vmul.f32 %v394, %v426
  %v443 = vmul.f32 %v395, %v427
  %v444 = vmul.f32 %v396, %v428
  %v445 = vmul.f32 %v397, %v429
  %v446 = vmul.f32 %v398, %v430
  %v447 = vmul.f32 %v399, %v431
  %v448 = vmul.f32 %v400, %v432
  %v449 = vmul.f32 %v401, %v433
  %v450 = vmul.f32 %v402, %v434
  %v451 = vmul.f32 %v403, %v435
  %v452 = vld [vmem:[%s2] sm:$0xff]
  %v453 = vld [vmem:[%s2 + $0x8] sm:$0xff]
  %v454 = vld [vmem:[%s2 + $0x10] sm:$0xff]
  %v455 = vld [vmem:[%s2 + $0x18] sm:$0xff]
  %v456 = vld [vmem:[%s2 + $0x20] sm:$0xff]
  %v457 = vld [vmem:[%s2 + $0x28] sm:$0xff]
  %v458 = vld [vmem:[%s2 + $0x30] sm:$0xff]
  %v459 = vld [vmem:[%s2 + $0x38] sm:$0xff]
  %v460 = vld [vmem:[%s2 + $0x40] sm:$0xff]
  %v461 = vld [vmem:[%s2 + $0x48] sm:$0xff]
  %v462 = vld [vmem:[%s2 + $0x50] sm:$0xff]
  %v463 = vld [vmem:[%s2 + $0x58] sm:$0xff]
  %v464 = vld [vmem:[%s2 + $0x60] sm:$0xff]
  %v465 = vld [vmem:[%s2 + $0x68] sm:$0xff]
  %v466 = vld [vmem:[%s2 + $0x70] sm:$0xff]
  %v467 = vld [vmem:[%s2 + $0x78] sm:$0xff]
  %v468 = vmul.f32 %v308, %v436
  %v469 = vmul.f32 %v309, %v437
  %v470 = vmul.f32 %v310, %v438
  %v471 = vmul.f32 %v311, %v439
  %v472 = vmul.f32 %v312, %v440
  %v473 = vmul.f32 %v313, %v441
  %v474 = vmul.f32 %v314, %v442
  %v475 = vmul.f32 %v315, %v443
  %v476 = vmul.f32 %v316, %v444
  %v477 = vmul.f32 %v317, %v445
  %v478 = vmul.f32 %v318, %v446
  %v479 = vmul.f32 %v319, %v447
  %v480 = vmul.f32 %v320, %v448
  %v481 = vmul.f32 %v321, %v449
  %v482 = vmul.f32 %v322, %v450
  %v483 = vmul.f32 %v323, %v451
  %v484 = vsub.f32 %v452, %v468
  %v485 = vsub.f32 %v453, %v469
  %v486 = vsub.f32 %v454, %v470
  %v487 = vsub.f32 %v455, %v471
  %v488 = vsub.f32 %v456, %v472
  %v489 = vsub.f32 %v457, %v473
  %v490 = vsub.f32 %v458, %v474
  %v491 = vsub.f32 %v459, %v475
  %v492 = vsub.f32 %v460, %v476
  %v493 = vsub.f32 %v461, %v477
  %v494 = vsub.f32 %v462, %v478
  %v495 = vsub.f32 %v463, %v479
  %v496 = vsub.f32 %v464, %v480
  %v497 = vsub.f32 %v465, %v481
  %v498 = vsub.f32 %v466, %v482
  %v499 = vsub.f32 %v467, %v483
  %v500 = vld [vmem:[%s3] sm:$0xff]
  %v501 = vld [vmem:[%s3 + $0x8] sm:$0xff]
  %v502 = vld [vmem:[%s3 + $0x10] sm:$0x7]
  %v503 = vld [vmem:[%s4] sm:$0xff]
  %v504 = vld [vmem:[%s4 + $0x8] sm:$0xff]
  %v505 = vld [vmem:[%s4 + $0x10] sm:$0x7]
  %507 = vset.pattern.permute.xlu0 0
  %508 = vperm.xlu0 %507, %v436
  %v509 = vpop.permute.xlu0 %508
  %512 = vset.pattern.permute.xlu0 0
  %513 = vperm.xlu0 %512, %v437
  %v514 = vpop.permute.xlu0 %513
  %517 = vset.pattern.permute.xlu0 0
  %518 = vperm.xlu0 %517, %v438
  %v519 = vpop.permute.xlu0 %518
  %522 = vset.pattern.permute.xlu0 0
  %523 = vperm.xlu0 %522, %v439
  %v524 = vpop.permute.xlu0 %523
  %527 = vset.pattern.permute.xlu0 0
  %528 = vperm.xlu0 %527, %v440
  %v529 = vpop.permute.xlu0 %528
  %532 = vset.pattern.permute.xlu0 0
  %533 = vperm.xlu0 %532, %v441
  %v534 = vpop.permute.xlu0 %533
  %537 = vset.pattern.permute.xlu0 0
  %538 = vperm.xlu0 %537, %v442
  %v539 = vpop.permute.xlu0 %538
  %542 = vset.pattern.permute.xlu0 0
  %543 = vperm.xlu0 %542, %v443
  %v544 = vpop.permute.xlu0 %543
  %547 = vset.pattern.permute.xlu0 0
  %548 = vperm.xlu0 %547, %v444
  %v549 = vpop.permute.xlu0 %548
  %552 = vset.pattern.permute.xlu0 0
  %553 = vperm.xlu0 %552, %v445
  %v554 = vpop.permute.xlu0 %553
  %557 = vset.pattern.permute.xlu0 0
  %558 = vperm.xlu0 %557, %v446
  %v559 = vpop.permute.xlu0 %558
  %562 = vset.pattern.permute.xlu0 0
  %563 = vperm.xlu0 %562, %v447
  %v564 = vpop.permute.xlu0 %563
  %567 = vset.pattern.permute.xlu0 0
  %568 = vperm.xlu0 %567, %v448
  %v569 = vpop.permute.xlu0 %568
  %572 = vset.pattern.permute.xlu0 0
  %573 = vperm.xlu0 %572, %v449
  %v574 = vpop.permute.xlu0 %573
  %577 = vset.pattern.permute.xlu0 0
  %578 = vperm.xlu0 %577, %v450
  %v579 = vpop.permute.xlu0 %578
  %582 = vset.pattern.permute.xlu0 0
  %583 = vperm.xlu0 %582, %v451
  %v584 = vpop.permute.xlu0 %583
  %v586 = vmul.f32 %v20, %v509
  %v587 = vmul.f32 %v21, %v509
  %v588 = vmul.f32 %v22, %v514
  %v589 = vmul.f32 %v23, %v514
  %v590 = vmul.f32 %v24, %v519
  %v591 = vmul.f32 %v25, %v519
  %v592 = vmul.f32 %v26, %v524
  %v593 = vmul.f32 %v27, %v524
  %v594 = vmul.f32 %v28, %v529
  %v595 = vmul.f32 %v29, %v529
  %v596 = vmul.f32 %v30, %v534
  %v597 = vmul.f32 %v31, %v534
  %v598 = vmul.f32 %v32, %v539
  %v599 = vmul.f32 %v33, %v539
  %v600 = vmul.f32 %v34, %v544
  %v601 = vmul.f32 %v35, %v544
  %v602 = vmul.f32 %v36, %v549
  %v603 = vmul.f32 %v37, %v549
  %v604 = vmul.f32 %v38, %v554
  %v605 = vmul.f32 %v39, %v554
  %v606 = vmul.f32 %v40, %v559
  %v607 = vmul.f32 %v41, %v559
  %v608 = vmul.f32 %v42, %v564
  %v609 = vmul.f32 %v43, %v564
  %v610 = vmul.f32 %v44, %v569
  %v611 = vmul.f32 %v45, %v569
  %v612 = vmul.f32 %v46, %v574
  %v613 = vmul.f32 %v47, %v574
  %v614 = vmul.f32 %v48, %v579
  %v615 = vmul.f32 %v49, %v579
  %v616 = vmul.f32 %v50, %v584
  %v617 = vmul.f32 %v51, %v584
  %619 = vset.pattern.permute.xlu0 0
  %620 = vperm.xlu0 %619, %v484
  %v621 = vpop.permute.xlu0 %620
  %624 = vset.pattern.permute.xlu0 0
  %625 = vperm.xlu0 %624, %v485
  %v626 = vpop.permute.xlu0 %625
  %629 = vset.pattern.permute.xlu0 0
  %630 = vperm.xlu0 %629, %v486
  %v631 = vpop.permute.xlu0 %630
  %634 = vset.pattern.permute.xlu0 0
  %635 = vperm.xlu0 %634, %v487
  %v636 = vpop.permute.xlu0 %635
  %639 = vset.pattern.permute.xlu0 0
  %640 = vperm.xlu0 %639, %v488
  %v641 = vpop.permute.xlu0 %640
  %644 = vset.pattern.permute.xlu0 0
  %645 = vperm.xlu0 %644, %v489
  %v646 = vpop.permute.xlu0 %645
  %649 = vset.pattern.permute.xlu0 0
  %650 = vperm.xlu0 %649, %v490
  %v651 = vpop.permute.xlu0 %650
  %654 = vset.pattern.permute.xlu0 0
  %655 = vperm.xlu0 %654, %v491
  %v656 = vpop.permute.xlu0 %655
  %659 = vset.pattern.permute.xlu0 0
  %660 = vperm.xlu0 %659, %v492
  %v661 = vpop.permute.xlu0 %660
  %664 = vset.pattern.permute.xlu0 0
  %665 = vperm.xlu0 %664, %v493
  %v666 = vpop.permute.xlu0 %665
  %669 = vset.pattern.permute.xlu0 0
  %670 = vperm.xlu0 %669, %v494
  %v671 = vpop.permute.xlu0 %670
  %674 = vset.pattern.permute.xlu0 0
  %675 = vperm.xlu0 %674, %v495
  %v676 = vpop.permute.xlu0 %675
  %679 = vset.pattern.permute.xlu0 0
  %680 = vperm.xlu0 %679, %v496
  %v681 = vpop.permute.xlu0 %680
  %684 = vset.pattern.permute.xlu0 0
  %685 = vperm.xlu0 %684, %v497
  %v686 = vpop.permute.xlu0 %685
  %689 = vset.pattern.permute.xlu0 0
  %690 = vperm.xlu0 %689, %v498
  %v691 = vpop.permute.xlu0 %690
  %694 = vset.pattern.permute.xlu0 0
  %695 = vperm.xlu0 %694, %v499
  %v696 = vpop.permute.xlu0 %695
  %v698 = vadd.f32 %v586, %v621
  %v699 = vadd.f32 %v587, %v621
  %v700 = vadd.f32 %v588, %v626
  %v701 = vadd.f32 %v589, %v626
  %v702 = vadd.f32 %v590, %v631
  %v703 = vadd.f32 %v591, %v631
  %v704 = vadd.f32 %v592, %v636
  %v705 = vadd.f32 %v593, %v636
  %v706 = vadd.f32 %v594, %v641
  %v707 = vadd.f32 %v595, %v641
  %v708 = vadd.f32 %v596, %v646
  %v709 = vadd.f32 %v597, %v646
  %v710 = vadd.f32 %v598, %v651
  %v711 = vadd.f32 %v599, %v651
  %v712 = vadd.f32 %v600, %v656
  %v713 = vadd.f32 %v601, %v656
  %v714 = vadd.f32 %v602, %v661
  %v715 = vadd.f32 %v603, %v661
  %v716 = vadd.f32 %v604, %v666
  %v717 = vadd.f32 %v605, %v666
  %v718 = vadd.f32 %v606, %v671
  %v719 = vadd.f32 %v607, %v671
  %v720 = vadd.f32 %v608, %v676
  %v721 = vadd.f32 %v609, %v676
  %v722 = vadd.f32 %v610, %v681
  %v723 = vadd.f32 %v611, %v681
  %v724 = vadd.f32 %v612, %v686
  %v725 = vadd.f32 %v613, %v686
  %v726 = vadd.f32 %v614, %v691
  %v727 = vadd.f32 %v615, %v691
  %v728 = vadd.f32 %v616, %v696
  %v729 = vadd.f32 %v617, %v696
  %v730 = vmax.f32 %v698, 0.0
  %v731 = vmax.f32 %v699, 0.0
  %v732 = vmax.f32 %v700, 0.0
  %v733 = vmax.f32 %v701, 0.0
  %v734 = vmax.f32 %v702, 0.0
  %v735 = vmax.f32 %v703, 0.0
  %v736 = vmax.f32 %v704, 0.0
  %v737 = vmax.f32 %v705, 0.0
  %v738 = vmax.f32 %v706, 0.0
  %v739 = vmax.f32 %v707, 0.0
  %v740 = vmax.f32 %v708, 0.0
  %v741 = vmax.f32 %v709, 0.0
  %v742 = vmax.f32 %v710, 0.0
  %v743 = vmax.f32 %v711, 0.0
  %v744 = vmax.f32 %v712, 0.0
  %v745 = vmax.f32 %v713, 0.0
  %v746 = vmax.f32 %v714, 0.0
  %v747 = vmax.f32 %v715, 0.0
  %v748 = vmax.f32 %v716, 0.0
  %v749 = vmax.f32 %v717, 0.0
  %v750 = vmax.f32 %v718, 0.0
  %v751 = vmax.f32 %v719, 0.0
  %v752 = vmax.f32 %v720, 0.0
  %v753 = vmax.f32 %v721, 0.0
  %v754 = vmax.f32 %v722, 0.0
  %v755 = vmax.f32 %v723, 0.0
  %v756 = vmax.f32 %v724, 0.0
  %v757 = vmax.f32 %v725, 0.0
  %v758 = vmax.f32 %v726, 0.0
  %v759 = vmax.f32 %v727, 0.0
  %v760 = vmax.f32 %v728, 0.0
  %v761 = vmax.f32 %v729, 0.0
  %763 = vset.pattern.permute.xlu0 0
  %764 = vperm.xlu0 %763, %v503
  %v765 = vpop.permute.xlu0 %764
  %768 = vset.pattern.permute.xlu0 0
  %769 = vperm.xlu0 %768, %v504
  %v770 = vpop.permute.xlu0 %769
  %773 = vset.pattern.permute.xlu0 0
  %774 = vperm.xlu0 %773, %v505
  %v775 = vpop.permute.xlu0 %774
  %777 = vmatprep.subr.mxu0 %v731
  %778 = vmatpush1.msra.mxu0 %v730
  %779 = vmatprep.subr.mxu0 %v733
  %780 = vmatpush1.msra.mxu0 %v732
  %781 = vmatprep.subr.mxu0 %v735
  %782 = vmatpush1.msra.mxu0 %v734
  %783 = vmatprep.subr.mxu0 %v737
  %784 = vmatpush1.msra.mxu0 %v736
  %785 = vmatprep.subr.mxu0 %v739
  %786 = vmatpush1.msra.mxu0 %v738
  %787 = vmatprep.subr.mxu0 %v741
  %788 = vmatpush1.msra.mxu0 %v740
  %789 = vmatprep.subr.mxu0 %v743
  %790 = vmatpush1.msra.mxu0 %v742
  %791 = vmatprep.subr.mxu0 %v745
  %792 = vmatpush1.msra.mxu0 %v744
  %793 = vmatprep.subr.mxu0 %v747
  %794 = vmatpush1.msra.mxu0 %v746
  %795 = vmatprep.subr.mxu0 %v749
  %796 = vmatpush1.msra.mxu0 %v748
  %797 = vmatprep.subr.mxu0 %v751
  %798 = vmatpush1.msra.mxu0 %v750
  %799 = vmatprep.subr.mxu0 %v753
  %800 = vmatpush1.msra.mxu0 %v752
  %801 = vmatprep.subr.mxu0 %v755
  %802 = vmatpush1.msra.mxu0 %v754
  %803 = vmatprep.subr.mxu0 %v757
  %804 = vmatpush1.msra.mxu0 %v756
  %805 = vmatprep.subr.mxu0 %v759
  %806 = vmatpush1.msra.mxu0 %v758
  %807 = vmatprep.subr.mxu0 %v761
  %808 = vmatpush1.msra.mxu0 %v760
  %809 = vmatprep.subr.mxu0 0.0
  %810 = vmatpush1.msra.mxu0 0.0
  %811 = vmatprep.subr.mxu0 0.0
  %812 = vmatpush1.msra.mxu0 0.0
  %813 = vmatprep.subr.mxu0 0.0
  %814 = vmatpush1.msra.mxu0 0.0
  %815 = vmatprep.subr.mxu0 0.0
  %816 = vmatpush1.msra.mxu0 0.0
  %817 = vmatprep.subr.mxu0 0.0
  %818 = vmatpush1.msra.mxu0 0.0
  %819 = vmatprep.subr.mxu0 0.0
  %820 = vmatpush1.msra.mxu0 0.0
  %821 = vmatprep.subr.mxu0 0.0
  %822 = vmatpush1.msra.mxu0 0.0
  %823 = vmatprep.subr.mxu0 0.0
  %824 = vmatpush1.msra.mxu0 0.0
  %825 = vmatprep.subr.mxu0 0.0
  %826 = vmatpush1.msra.mxu0 0.0
  %827 = vmatprep.subr.mxu0 0.0
  %828 = vmatpush1.msra.mxu0 0.0
  %829 = vmatprep.subr.mxu0 0.0
  %830 = vmatpush1.msra.mxu0 0.0
  %831 = vmatprep.subr.mxu0 0.0
  %832 = vmatpush1.msra.mxu0 0.0
  %833 = vmatprep.subr.mxu0 0.0
  %834 = vmatpush1.msra.mxu0 0.0
  %835 = vmatprep.subr.mxu0 0.0
  %836 = vmatpush1.msra.mxu0 0.0
  %837 = vmatprep.subr.mxu0 0.0
  %838 = vmatpush1.msra.mxu0 0.0
  %839 = vmatprep.subr.mxu0 0.0
  %840 = vmatpush1.msra.mxu0 0.0
  %841 = vmatprep.mubr.f32.mxu0 0.0
  %842 = vmatmul.mubr.f32.gmra.mrb[0].mxu0 %v500
  %v843 = vpop.f32.mrb[0].mxu0
  %v844 = vadd.f32 %v765, %v843
  %v845 = vpop.f32.mrb[0].mxu0
  %v846 = vadd.f32 %v765, %v845
  %847 = vmatprep.mubr.f32.mxu0 0.0
  %848 = vmatmul.mubr.f32.gmra.mrb[0].mxu0 %v501
  %v849 = vpop.f32.mrb[0].mxu0
  %v850 = vadd.f32 %v770, %v849
  %v851 = vpop.f32.mrb[0].mxu0
  %v852 = vadd.f32 %v770, %v851
  %853 = vmatprep.mubr.f32.mxu0 0.0
  %854 = vmatmul.mubr.f32.gmra.mrb[0].mxu0 %v502
  %v855 = vpop.f32.mrb[0].mxu0
  %v856 = vadd.f32 %v775, %v855
  %v857 = vpop.f32.mrb[0].mxu0
  %v858 = vadd.f32 %v775, %v857
  %859 = vdwg.mxu0
  %860 = vst [vmem:[%s5] sm:$0xff] %v844
  %861 = vst [vmem:[%s5 + $0x8] sm:$0xff] %v846
  %862 = vst [vmem:[%s5 + $0x10] sm:$0xff] %v850
  %863 = vst [vmem:[%s5 + $0x18] sm:$0xff] %v852
  %864 = vst [vmem:[%s5 + $0x20] sm:$0x7] %v856
  %865 = vst [vmem:[%s5 + $0x28] sm:$0x7] %v858
  %v866 = vmul.f32 %v52, %v509
  %v867 = vmul.f32 %v53, %v509
  %v868 = vmul.f32 %v54, %v514
  %v869 = vmul.f32 %v55, %v514
  %v870 = vmul.f32 %v56, %v519
  %v871 = vmul.f32 %v57, %v519
  %v872 = vmul.f32 %v58, %v524
  %v873 = vmul.f32 %v59, %v524
  %v874 = vmul.f32 %v60, %v529
  %v875 = vmul.f32 %v61, %v529
  %v876 = vmul.f32 %v62, %v534
  %v877 = vmul.f32 %v63, %v534
  %v878 = vmul.f32 %v64, %v539
  %v879 = vmul.f32 %v65, %v539
  %v880 = vmul.f32 %v66, %v544
  %v881 = vmul.f32 %v67, %v544
  %v882 = vmul.f32 %v68, %v549
  %v883 = vmul.f32 %v69, %v549
  %v884 = vmul.f32 %v70, %v554
  %v885 = vmul.f32 %v71, %v554
  %v886 = vmul.f32 %v72, %v559
  %v887 = vmul.f32 %v73, %v559
  %v888 = vmul.f32 %v74, %v564
  %v889 = vmul.f32 %v75, %v564
  %v890 = vmul.f32 %v76, %v569
  %v891 = vmul.f32 %v77, %v569
  %v892 = vmul.f32 %v78, %v574
  %v893 = vmul.f32 %v79, %v574
  %v894 = vmul.f32 %v80, %v579
  %v895 = vmul.f32 %v81, %v579
  %v896 = vmul.f32 %v82, %v584
  %v897 = vmul.f32 %v83, %v584
  %v898 = vadd.f32 %v866, %v621
  %v899 = vadd.f32 %v867, %v621
  %v900 = vadd.f32 %v868, %v626
  %v901 = vadd.f32 %v869, %v626
  %v902 = vadd.f32 %v870, %v631
  %v903 = vadd.f32 %v871, %v631
  %v904 = vadd.f32 %v872, %v636
  %v905 = vadd.f32 %v873, %v636
  %v906 = vadd.f32 %v874, %v641
  %v907 = vadd.f32 %v875, %v641
  %v908 = vadd.f32 %v876, %v646
  %v909 = vadd.f32 %v877, %v646
  %v910 = vadd.f32 %v878, %v651
  %v911 = vadd.f32 %v879, %v651
  %v912 = vadd.f32 %v880, %v656
  %v913 = vadd.f32 %v881, %v656
  %v914 = vadd.f32 %v882, %v661
  %v915 = vadd.f32 %v883, %v661
  %v916 = vadd.f32 %v884, %v666
  %v917 = vadd.f32 %v885, %v666
  %v918 = vadd.f32 %v886, %v671
  %v919 = vadd.f32 %v887, %v671
  %v920 = vadd.f32 %v888, %v676
  %v921 = vadd.f32 %v889, %v676
  %v922 = vadd.f32 %v890, %v681
  %v923 = vadd.f32 %v891, %v681
  %v924 = vadd.f32 %v892, %v686
  %v925 = vadd.f32 %v893, %v686
  %v926 = vadd.f32 %v894, %v691
  %v927 = vadd.f32 %v895, %v691
  %v928 = vadd.f32 %v896, %v696
  %v929 = vadd.f32 %v897, %v696
  %v930 = vmax.f32 %v898, 0.0
  %v931 = vmax.f32 %v899, 0.0
  %v932 = vmax.f32 %v900, 0.0
  %v933 = vmax.f32 %v901, 0.0
  %v934 = vmax.f32 %v902, 0.0
  %v935 = vmax.f32 %v903, 0.0
  %v936 = vmax.f32 %v904, 0.0
  %v937 = vmax.f32 %v905, 0.0
  %v938 = vmax.f32 %v906, 0.0
  %v939 = vmax.f32 %v907, 0.0
  %v940 = vmax.f32 %v908, 0.0
  %v941 = vmax.f32 %v909, 0.0
  %v942 = vmax.f32 %v910, 0.0
  %v943 = vmax.f32 %v911, 0.0
  %v944 = vmax.f32 %v912, 0.0
  %v945 = vmax.f32 %v913, 0.0
  %v946 = vmax.f32 %v914, 0.0
  %v947 = vmax.f32 %v915, 0.0
  %v948 = vmax.f32 %v916, 0.0
  %v949 = vmax.f32 %v917, 0.0
  %v950 = vmax.f32 %v918, 0.0
  %v951 = vmax.f32 %v919, 0.0
  %v952 = vmax.f32 %v920, 0.0
  %v953 = vmax.f32 %v921, 0.0
  %v954 = vmax.f32 %v922, 0.0
  %v955 = vmax.f32 %v923, 0.0
  %v956 = vmax.f32 %v924, 0.0
  %v957 = vmax.f32 %v925, 0.0
  %v958 = vmax.f32 %v926, 0.0
  %v959 = vmax.f32 %v927, 0.0
  %v960 = vmax.f32 %v928, 0.0
  %v961 = vmax.f32 %v929, 0.0
  %962 = vmatprep.subr.mxu0 %v931
  %963 = vmatpush1.msra.mxu0 %v930
  %964 = vmatprep.subr.mxu0 %v933
  %965 = vmatpush1.msra.mxu0 %v932
  %966 = vmatprep.subr.mxu0 %v935
  %967 = vmatpush1.msra.mxu0 %v934
  %968 = vmatprep.subr.mxu0 %v937
  %969 = vmatpush1.msra.mxu0 %v936
  %970 = vmatprep.subr.mxu0 %v939
  %971 = vmatpush1.msra.mxu0 %v938
  %972 = vmatprep.subr.mxu0 %v941
  %973 = vmatpush1.msra.mxu0 %v940
  %974 = vmatprep.subr.mxu0 %v943
  %975 = vmatpush1.msra.mxu0 %v942
  %976 = vmatprep.subr.mxu0 %v945
  %977 = vmatpush1.msra.mxu0 %v944
  %978 = vmatprep.subr.mxu0 %v947
  %979 = vmatpush1.msra.mxu0 %v946
  %980 = vmatprep.subr.mxu0 %v949
  %981 = vmatpush1.msra.mxu0 %v948
  %982 = vmatprep.subr.mxu0 %v951
  %983 = vmatpush1.msra.mxu0 %v950
  %984 = vmatprep.subr.mxu0 %v953
  %985 = vmatpush1.msra.mxu0 %v952
  %986 = vmatprep.subr.mxu0 %v955
  %987 = vmatpush1.msra.mxu0 %v954
  %988 = vmatprep.subr.mxu0 %v957
  %989 = vmatpush1.msra.mxu0 %v956
  %990 = vmatprep.subr.mxu0 %v959
  %991 = vmatpush1.msra.mxu0 %v958
  %992 = vmatprep.subr.mxu0 %v961
  %993 = vmatpush1.msra.mxu0 %v960
  %994 = vmatprep.subr.mxu0 0.0
  %995 = vmatpush1.msra.mxu0 0.0
  %996 = vmatprep.subr.mxu0 0.0
  %997 = vmatpush1.msra.mxu0 0.0
  %998 = vmatprep.subr.mxu0 0.0
  %999 = vmatpush1.msra.mxu0 0.0
  %1000 = vmatprep.subr.mxu0 0.0
  %1001 = vmatpush1.msra.mxu0 0.0
  %1002 = vmatprep.subr.mxu0 0.0
  %1003 = vmatpush1.msra.mxu0 0.0
  %1004 = vmatprep.subr.mxu0 0.0
  %1005 = vmatpush1.msra.mxu0 0.0
  %1006 = vmatprep.subr.mxu0 0.0
  %1007 = vmatpush1.msra.mxu0 0.0
  %1008 = vmatprep.subr.mxu0 0.0
  %1009 = vmatpush1.msra.mxu0 0.0
  %1010 = vmatprep.subr.mxu0 0.0
  %1011 = vmatpush1.msra.mxu0 0.0
  %1012 = vmatprep.subr.mxu0 0.0
  %1013 = vmatpush1.msra.mxu0 0.0
  %1014 = vmatprep.subr.mxu0 0.0
  %1015 = vmatpush1.msra.mxu0 0.0
  %1016 = vmatprep.subr.mxu0 0.0
  %1017 = vmatpush1.msra.mxu0 0.0
  %1018 = vmatprep.subr.mxu0 0.0
  %1019 = vmatpush1.msra.mxu0 0.0
  %1020 = vmatprep.subr.mxu0 0.0
  %1021 = vmatpush1.msra.mxu0 0.0
  %1022 = vmatprep.subr.mxu0 0.0
  %1023 = vmatpush1.msra.mxu0 0.0
  %1024 = vmatprep.subr.mxu0 0.0
  %1025 = vmatpush1.msra.mxu0 0.0
  %1026 = vmatprep.mubr.f32.mxu0 0.0
  %1027 = vmatmul.mubr.f32.gmra.mrb[0].mxu0 %v500
  %v1028 = vpop.f32.mrb[0].mxu0
  %v1029 = vadd.f32 %v765, %v1028
  %v1030 = vpop.f32.mrb[0].mxu0
  %v1031 = vadd.f32 %v765, %v1030
  %1032 = vmatprep.mubr.f32.mxu0 0.0
  %1033 = vmatmul.mubr.f32.gmra.mrb[0].mxu0 %v501
  %v1034 = vpop.f32.mrb[0].mxu0
  %v1035 = vadd.f32 %v770, %v1034
  %v1036 = vpop.f32.mrb[0].mxu0
  %v1037 = vadd.f32 %v770, %v1036
  %1038 = vmatprep.mubr.f32.mxu0 0.0
  %1039 = vmatmul.mubr.f32.gmra.mrb[0].mxu0 %v502
  %v1040 = vpop.f32.mrb[0].mxu0
  %v1041 = vadd.f32 %v775, %v1040
  %v1042 = vpop.f32.mrb[0].mxu0
  %v1043 = vadd.f32 %v775, %v1042
  %1044 = vdwg.mxu0
  %s1045 = scalar_lea.vmem %s5, 48
  %1046 = vst [vmem:[%s1045] sm:$0xff] %v1029
  %1047 = vst [vmem:[%s1045 + $0x8] sm:$0xff] %v1031
  %1048 = vst [vmem:[%s1045 + $0x10] sm:$0xff] %v1035
  %1049 = vst [vmem:[%s1045 + $0x18] sm:$0xff] %v1037
  %1050 = vst [vmem:[%s1045 + $0x20] sm:$0x7] %v1041
  %1051 = vst [vmem:[%s1045 + $0x28] sm:$0x7] %v1043
  // Predicated region
  $region22: #{swiftnet_forward.1} parent=0 // pred_check
    _
  $region23: #{swiftnet_forward.1} parent=0 // pred_check_branch
    %1053 = sbr.rel (0) target = $region25
  $region24: #{swiftnet_forward.1} parent=0 // pred_region
    _
  $region25: #{swiftnet_forward.1} parent=0 // pred_fallthru
    _
  // Predicated region
  $region26: #{swiftnet_forward.1} parent=0 // pred_check
    _
  $region27: #{swiftnet_forward.1} parent=0 // pred_check_branch
    %1055 = sbr.rel (0) target = $region29
  $region28: #{swiftnet_forward.1} parent=0 // pred_region
    _
  $region29: #{swiftnet_forward.1} parent=0 // pred_fallthru
    _

</llo_original>
